<compile_context>
chip_gen: v5e
topology: v5e:2x2
jax: 0.10.0
libtpu: 0.0.40
codegen_flags: <defaults>
</compile_context>

<pallas_src>
import functools

import jax
import jax.numpy as jnp
from jax.experimental import pallas as pl
from jax.experimental.pallas import tpu as pltpu

_LANE = 128      # feature dims are zero-padded to a multiple of this (lane-dense)


def _round_up(x, m):
    return ((x + m - 1) // m) * m


def _fused_mlp_kernel(x_ref, w_ref, b_ref, o_ref, *, dims):
    """Fused (Linear -> ReLU)* -> Linear -> Sigmoid.

    x_ref : (B, dims[0])   f32   logical (unpadded) input
    w_ref : (L, Dp, Dp)    bf16  pre-transposed (n_in, n_out) weights, zero-padded
    b_ref : (L, 1, Dp)     f32   zero-padded biases
    o_ref : (B, dims[-1])  f32   logical output

    Zero padding of the extra weight rows/cols keeps padded activation columns
    exactly 0 through bias + ReLU, so no masking is needed between layers.
    """
    n_layers = len(dims) - 1
    mxu_dtype = w_ref.dtype
    h = x_ref[...]                                          # (B, dims[0]) f32
    for i in range(n_layers):
        w = w_ref[i]                                        # (Dp, Dp), static index
        if i == 0 and dims[0] < w.shape[0]:
            w = w[0:dims[0], :]                             # only the real input rows
        y = jnp.dot(h.astype(mxu_dtype), w,
                    preferred_element_type=jnp.float32)     # MXU, f32 accumulation
        y = y + b_ref[i]                                    # (1, Dp) broadcast, f32
        if i < n_layers - 1:
            h = jnp.maximum(y, 0.0)                         # ReLU (VPU, f32: v5e-safe)
        else:
            h = jax.nn.sigmoid(y)                           # Sigmoid (EUP, f32)
    o_ref[...] = h[:, 0:dims[-1]]                           # drop padded output columns


def init_params(layers, key):
    """Deterministic init matching the PyTorch module (PyTorch (n_out, n_in) layout)."""
    params = []
    for i in range(len(layers) - 1):
        n_in, n_out = layers[i], layers[i + 1]
        a = 1.0 if i == 0 else 2.0
        key, sub = jax.random.split(key)
        w = jax.random.normal(sub, (n_out, n_in), dtype=jnp.float32) * jnp.sqrt(a / n_in)
        b = jnp.zeros((n_out,), dtype=jnp.float32)
        params.append((w, b))
    return params


def pack_params(params, n_in0, weights_dtype=jnp.bfloat16):
    """One-time prep: transpose to (n_in, n_out), zero-pad feature dims to the
    lane-padded width, and stack everything into one weight slab + one bias slab."""
    dims = [n_in0] + [int(w.shape[0]) for w, _ in params]
    d_pad = _round_up(max(dims), _LANE)
    ws, bs = [], []
    for i, (w, bvec) in enumerate(params):
        wt = jnp.transpose(w).astype(jnp.float32)            # (n_in, n_out)
        wt_p = jnp.pad(wt, ((0, d_pad - dims[i]), (0, d_pad - dims[i + 1])))
        ws.append(wt_p.astype(weights_dtype))
        bs.append(jnp.pad(bvec.astype(jnp.float32).reshape(1, -1),
                          ((0, 0), (0, d_pad - dims[i + 1]))))
    w_packed = jnp.stack(ws)                                  # (L, d_pad, d_pad)
    b_packed = jnp.stack(bs)                                  # (L, 1, d_pad)
    return w_packed, b_packed, tuple(dims), d_pad


def net_forward(x, w_packed, b_packed, *, dims, d_pad):
    """Forward pass of Net as a single fused, gridless Pallas kernel."""
    batch, n_in = x.shape
    assert n_in == dims[0]
    n_layers = len(dims) - 1
    assert w_packed.shape == (n_layers, d_pad, d_pad)
    assert b_packed.shape == (n_layers, 1, d_pad)

    # Scheduler hint computed from LOGICAL dims (not the 128-padded ones).
    flops = sum(2 * batch * dims[i] * dims[i + 1] for i in range(n_layers))
    bytes_accessed = 4 * (batch * dims[0]
                          + sum(dims[i] * dims[i + 1] + dims[i + 1]
                                for i in range(n_layers))
                          + batch * dims[-1])
    cost = pl.CostEstimate(flops=flops,
                           transcendentals=batch * dims[-1],
                           bytes_accessed=bytes_accessed)

    # Scaling guard: today's footprint is ~0.2 MiB; keep an explicit VMEM limit so
    # the all-weights-resident design fails loudly instead of silently if dims grow
    # (v7x physical VMEM is 64 MiB per TensorCore).
    io_bytes = (x.size * x.dtype.itemsize
                + w_packed.size * w_packed.dtype.itemsize
                + b_packed.size * b_packed.dtype.itemsize
                + batch * dims[-1] * 4)
    vmem_limit = int(min(64 << 20, max(4 << 20, 4 * io_bytes)))

    vmem = pltpu.MemorySpace.VMEM
    out = pl.pallas_call(
        functools.partial(_fused_mlp_kernel, dims=dims),
        out_shape=jax.ShapeDtypeStruct((batch, dims[-1]), jnp.float32),
        # No grid: everything fits in VMEM; exactly 3 full-array input DMA windows.
        in_specs=[pl.BlockSpec(memory_space=vmem),   # x  (B, dims[0])
                  pl.BlockSpec(memory_space=vmem),   # W  (L, Dp, Dp) bf16
                  pl.BlockSpec(memory_space=vmem)],  # b  (L, 1, Dp)  f32
        out_specs=pl.BlockSpec(memory_space=vmem),
        compiler_params=pltpu.CompilerParams(vmem_limit_bytes=vmem_limit),
        cost_estimate=cost,
    )(x.astype(jnp.float32), w_packed, b_packed)

    # TODO(synk): when batch scales (>=256 rows per tile), add a grid over batch
    # tiles with dimension_semantics=("parallel",) and constant weight/bias
    # index_maps so v7x's two TensorCores split the rows; switch to a K/N-tiled
    # grid once hidden dims reach ~1-2K so the design stays within v7x's 64 MiB VMEM.
    return out


if __name__ == "__main__":
    layers = [16, 32, 32, 8]     # MLP structure: 2 hidden ReLU layers + sigmoid head
    batch = 8

    key = jax.random.PRNGKey(0)
    key, xkey = jax.random.split(key)
    x = jax.random.normal(xkey, (batch, layers[0]), dtype=jnp.float32)

    params = init_params(layers, key)
    w_packed, b_packed, dims, d_pad = pack_params(params, layers[0],
                                                  weights_dtype=jnp.bfloat16)

    fwd = jax.jit(functools.partial(net_forward, dims=dims, d_pad=d_pad))
    out = jax.block_until_ready(fwd(x, w_packed, b_packed))

    # Plain-JAX f32 reference (PyTorch-layout weights, highest precision).
    h = x
    for w, b in params[:-1]:
        h = jnp.maximum(jnp.dot(h, w.T, precision=jax.lax.Precision.HIGHEST) + b, 0.0)
    w, b = params[-1]
    ref = jax.nn.sigmoid(jnp.dot(h, w.T, precision=jax.lax.Precision.HIGHEST) + b)

    assert out.shape == (batch, layers[-1])
    assert bool(jnp.all(jnp.isfinite(out)))
    assert bool(jnp.all((out > 0.0) & (out < 1.0)))               # sigmoid range
    # bf16 weights on the MXU (f32 accumulation) -> bf16-ish tolerance vs f32 ref.
    max_err = float(jnp.max(jnp.abs(out - ref)))
    assert bool(jnp.allclose(out, ref, atol=2e-2, rtol=2e-2)), max_err

    print("KERNEL_OK")
</pallas_src>

<mosaic_0001>
module attributes {stable_mosaic.version = 11 : i64} {
  func.func @_fused_mlp_kernel(%arg0: memref<8x16xf32, #tpu.memory_space<vmem>>, %arg1: memref<3x128x128xbf16, #tpu.memory_space<vmem>>, %arg2: memref<3x1x128xf32, #tpu.memory_space<vmem>>, %arg3: memref<8x8xf32, #tpu.memory_space<vmem>>) attributes {dimension_semantics = [], scalar_prefetch = 0 : i64, scratch_operands = 0 : i64, tpu.core_type = #tpu.core_type<tc>} {
    %c0 = arith.constant 0 : index
    %c0_0 = arith.constant 0 : index
    %0 = vector.load %arg0[%c0, %c0_0] : memref<8x16xf32, #tpu.memory_space<vmem>>, vector<8x16xf32>
    %c0_1 = arith.constant 0 : index
    %c0_2 = arith.constant 0 : index
    %c0_3 = arith.constant 0 : index
    %1 = vector.load %arg1[%c0_1, %c0_2, %c0_3] : memref<3x128x128xbf16, #tpu.memory_space<vmem>>, vector<1x128x128xbf16>
    %2 = vector.shape_cast %1 : vector<1x128x128xbf16> to vector<128x128xbf16>
    %3 = vector.extract_strided_slice %2 {offsets = [0, 0], sizes = [16, 128], strides = [1, 1]} : vector<128x128xbf16> to vector<16x128xbf16>
    %4 = arith.truncf %0 : vector<8x16xf32> to vector<8x16xbf16>
    %cst = arith.constant dense<0.000000e+00> : vector<8x128xf32>
    %5 = tpu.matmul %4, %3, %cst {dimension_numbers = #tpu.dot_dimension_numbers<[1], [0], [0], [1], [0, 0, 1, 1], [], []>} : vector<8x16xbf16>, vector<16x128xbf16>, vector<8x128xf32> -> vector<8x128xf32>
    %c0_4 = arith.constant 0 : index
    %c0_5 = arith.constant 0 : index
    %c0_6 = arith.constant 0 : index
    %6 = vector.load %arg2[%c0_4, %c0_5, %c0_6] : memref<3x1x128xf32, #tpu.memory_space<vmem>>, vector<1x1x128xf32>
    %7 = vector.shape_cast %6 : vector<1x1x128xf32> to vector<1x128xf32>
    %8 = vector.broadcast %7 : vector<1x128xf32> to vector<8x128xf32>
    %9 = arith.addf %5, %8 : vector<8x128xf32>
    %cst_7 = arith.constant 0.000000e+00 : f32
    %10 = vector.broadcast %cst_7 : f32 to vector<8x128xf32>
    %11 = arith.maximumf %9, %10 : vector<8x128xf32>
    %c1 = arith.constant 1 : index
    %c0_8 = arith.constant 0 : index
    %c0_9 = arith.constant 0 : index
    %12 = vector.load %arg1[%c1, %c0_8, %c0_9] : memref<3x128x128xbf16, #tpu.memory_space<vmem>>, vector<1x128x128xbf16>
    %13 = vector.shape_cast %12 : vector<1x128x128xbf16> to vector<128x128xbf16>
    %14 = arith.truncf %11 : vector<8x128xf32> to vector<8x128xbf16>
    %cst_10 = arith.constant dense<0.000000e+00> : vector<8x128xf32>
    %15 = tpu.matmul %14, %13, %cst_10 {dimension_numbers = #tpu.dot_dimension_numbers<[1], [0], [0], [1], [0, 0, 1, 1], [], []>} : vector<8x128xbf16>, vector<128x128xbf16>, vector<8x128xf32> -> vector<8x128xf32>
    %c1_11 = arith.constant 1 : index
    %c0_12 = arith.constant 0 : index
    %c0_13 = arith.constant 0 : index
    %16 = vector.load %arg2[%c1_11, %c0_12, %c0_13] : memref<3x1x128xf32, #tpu.memory_space<vmem>>, vector<1x1x128xf32>
    %17 = vector.shape_cast %16 : vector<1x1x128xf32> to vector<1x128xf32>
    %18 = vector.broadcast %17 : vector<1x128xf32> to vector<8x128xf32>
    %19 = arith.addf %15, %18 : vector<8x128xf32>
    %cst_14 = arith.constant 0.000000e+00 : f32
    %20 = vector.broadcast %cst_14 : f32 to vector<8x128xf32>
    %21 = arith.maximumf %19, %20 : vector<8x128xf32>
    %c2 = arith.constant 2 : index
    %c0_15 = arith.constant 0 : index
    %c0_16 = arith.constant 0 : index
    %22 = vector.load %arg1[%c2, %c0_15, %c0_16] : memref<3x128x128xbf16, #tpu.memory_space<vmem>>, vector<1x128x128xbf16>
    %23 = vector.shape_cast %22 : vector<1x128x128xbf16> to vector<128x128xbf16>
    %24 = arith.truncf %21 : vector<8x128xf32> to vector<8x128xbf16>
    %cst_17 = arith.constant dense<0.000000e+00> : vector<8x128xf32>
    %25 = tpu.matmul %24, %23, %cst_17 {dimension_numbers = #tpu.dot_dimension_numbers<[1], [0], [0], [1], [0, 0, 1, 1], [], []>} : vector<8x128xbf16>, vector<128x128xbf16>, vector<8x128xf32> -> vector<8x128xf32>
    %c2_18 = arith.constant 2 : index
    %c0_19 = arith.constant 0 : index
    %c0_20 = arith.constant 0 : index
    %26 = vector.load %arg2[%c2_18, %c0_19, %c0_20] : memref<3x1x128xf32, #tpu.memory_space<vmem>>, vector<1x1x128xf32>
    %27 = vector.shape_cast %26 : vector<1x1x128xf32> to vector<1x128xf32>
    %28 = vector.broadcast %27 : vector<1x128xf32> to vector<8x128xf32>
    %29 = arith.addf %25, %28 : vector<8x128xf32>
    %30 = arith.negf %29 : vector<8x128xf32>
    %31 = math.exp %30 : vector<8x128xf32>
    %cst_21 = arith.constant 1.000000e+00 : f32
    %32 = vector.broadcast %cst_21 : f32 to vector<8x128xf32>
    %33 = arith.addf %32, %31 : vector<8x128xf32>
    %34 = arith.divf %32, %33 : vector<8x128xf32>
    %35 = vector.extract_strided_slice %34 {offsets = [0, 0], sizes = [8, 8], strides = [1, 1]} : vector<8x128xf32> to vector<8x8xf32>
    %c0_22 = arith.constant 0 : index
    %c0_23 = arith.constant 0 : index
    %36 = vector.load %arg3[%c0_22, %c0_23] : memref<8x8xf32, #tpu.memory_space<vmem>>, vector<8x8xf32>
    tpu.vector_store %arg3[%c0_22, %c0_23], %35 {strides = array<i32>} : memref<8x8xf32, #tpu.memory_space<vmem>>, vector<8x8xf32>,
    return
  }
}

</mosaic_0001>

<llo_original>
// kernel: net_forward.1
$region0: #{net_forward.1}
  #allocation0 [shape = 'u32[]', space=smem, size = 0x4, offset = 0x4, fixed_abs, tag = 'smem constant byte address 0x4 - core index']
  #allocation1 [shape = 'u32[72,128]{1,0:T(1,128)}', space=vmem, size = 0x9000, scoped, tag = 'internal scratch']
  %s0 = inlined_call_operand.hbm [shape: f32[8,16], index: 0, kind: input, shape index: {}]
  %s1 = inlined_call_operand.hbm [shape: bf16[3,128,128], index: 1, kind: input, shape index: {}]
  %s2 = inlined_call_operand.hbm [shape: f32[3,1,128], index: 2, kind: input, shape index: {}]
  %s3 = inlined_call_operand.hbm [shape: f32[8,8], index: 3, kind: output, shape index: {}]
  %s4 = sld [smem:[#allocation0]]
  $region34: #{net_forward.1} parent=0
    _
  %s6 = ssub.s32 1, %s4
  %s7 = scalar_select 0, %s6, %s4
  $region1: #{net_forward.1} parent=0
    #allocation2 [shape = 'u8[4096]{0}', space=vmem, size = 0x1000, scoped, tag = 'input window, operand 0, single buffered']
    #allocation3 [shape = 's32[1]{0}', space=sflag, size = 0x4, scoped, tag = 'scoped memory for net_forward.1']
    #allocation4 [shape = 's32[1]{0}', space=sflag, size = 0x4, scoped, tag = 'scoped memory for net_forward.1']
    #allocation5 [shape = 'u8[98304]{0}', space=vmem, size = 0x18000, scoped, tag = 'input window, operand 1, single buffered']
    #allocation6 [shape = 's32[1]{0}', space=sflag, size = 0x4, scoped, tag = 'scoped memory for net_forward.1']
    #allocation7 [shape = 'u8[1536]{0}', space=vmem, size = 0x800, scoped, tag = 'input window, operand 2, single buffered']
    #allocation8 [shape = 'u8[4096]{0}', space=vmem, size = 0x1000, scoped, tag = 'output window, operand 0, single buffered']
    %8 = vsyncpa [#allocation3], 0
    %9 = vsyncpa [#allocation6], 0
    %10 = vsyncpa [#allocation4], 0
    // Predicated region
    $region2: #{net_forward.1} parent=1 // pred_check
      _
    $region3: #{net_forward.1} parent=1 // pred_check_branch
      %12 = sbr.rel (0) target = $region5
    $region4: #{net_forward.1} parent=1 // pred_region
      %14 = vsyncadd [#allocation3], 0
      %s16 = sshll.u32 %s0, 4
      %s17 = int_to_ptr.hbm [resolvable:$true] %s16
      %s18 = sshll.u32 [#allocation2], 4
      %s19 = int_to_ptr.vmem [resolvable:$true] %s18
      %21 = dma.hbm_to_vmem [thread:$0]  %s17, 128, %s19, [#allocation3]
    $region5: #{net_forward.1} parent=1 // pred_fallthru
      _
    // Predicated region
    $region6: #{net_forward.1} parent=1 // pred_check
      _
    $region7: #{net_forward.1} parent=1 // pred_check_branch
      %23 = sbr.rel (0) target = $region9
    $region8: #{net_forward.1} parent=1 // pred_region
      %25 = vsyncadd [#allocation6], 0
      %s26 = sshll.u32 %s1, 4
      %s27 = int_to_ptr.hbm [resolvable:$true] %s26
      %s28 = sshll.u32 [#allocation5], 4
      %s29 = int_to_ptr.vmem [resolvable:$true] %s28
      %34 = dma.hbm_to_vmem [thread:$0]  %s27, 3072, %s29, [#allocation6], 64, 64, 4
    $region9: #{net_forward.1} parent=1 // pred_fallthru
      _
    // Predicated region
    $region10: #{net_forward.1} parent=1 // pred_check
      _
    $region11: #{net_forward.1} parent=1 // pred_check_branch
      %36 = sbr.rel (0) target = $region13
    $region12: #{net_forward.1} parent=1 // pred_region
      %38 = vsyncadd [#allocation6], 0
      %s39 = sshll.u32 %s2, 4
      %s40 = int_to_ptr.hbm [resolvable:$true] %s39
      %s41 = sshll.u32 [#allocation7], 4
      %s42 = int_to_ptr.vmem [resolvable:$true] %s41
      %47 = dma.hbm_to_vmem [thread:$0]  %s40, 48, %s42, [#allocation6], 16, 16, 1
    $region13: #{net_forward.1} parent=1 // pred_fallthru
      _
    // Predicated region
    $region14: #{net_forward.1} parent=1 // pred_check
      _
    $region15: #{net_forward.1} parent=1 // pred_check_branch
      %49 = sbr.rel (0) target = $region17
    $region16: #{net_forward.1} parent=1 // pred_region
      %51 = dma.done [#allocation3], 128
    $region17: #{net_forward.1} parent=1 // pred_fallthru
      _
    // Predicated region
    $region18: #{net_forward.1} parent=1 // pred_check
      _
    $region19: #{net_forward.1} parent=1 // pred_check_branch
      %53 = sbr.rel (0) target = $region21
    $region20: #{net_forward.1} parent=1 // pred_region
      %55 = dma.done [#allocation6], 3072
    $region21: #{net_forward.1} parent=1 // pred_fallthru
      _
    // Predicated region
    $region22: #{net_forward.1} parent=1 // pred_check
      _
    $region23: #{net_forward.1} parent=1 // pred_check_branch
      %57 = sbr.rel (0) target = $region25
    $region24: #{net_forward.1} parent=1 // pred_region
      %59 = dma.done [#allocation6], 48
    $region25: #{net_forward.1} parent=1 // pred_fallthru
      _
    %v61 = vld [vmem:[#allocation2] sm:$0xff]
    %v62 = vld [vmem:[#allocation5] sm:$0xf]
    %v63 = vld [vmem:[#allocation5 + $0x4] sm:$0xf]
    %v64 = vpack.c.bf16 %v61, %v61
    %v65 = vld [vmem:[#allocation7] sm:$0x1]
    %v67 = vperm.slane %v65, 0
    %v71 = vunpack.c.l.b16 %v62
    %v72 = vunpack.c.l.b16 %v63
    %v73 = vpack.c.b16 %v72, %v71
    %vm75 = vcmask 130048
    %v77 = vsel %vm75, %v64, 0
    %79 = vmatpush.bf16.msra.mxu0 0
    %80 = vmatpush.bf16.msra.mxu0 0
    %81 = vmatpush.bf16.msra.mxu0 0
    %82 = vmatpush.bf16.msra.mxu0 0
    %83 = vmatpush.bf16.msra.mxu0 0
    %84 = vmatpush.bf16.msra.mxu0 0
    %85 = vmatpush.bf16.msra.mxu0 0
    %86 = vmatpush.bf16.msra.mxu0 %v73
    %87 = vmatmul.bf16.gmra.mxu0 %v77
    %v88 = vpop.f32.mrf.mxu0
    %v89 = vadd.f32 %v67, %v88
    %v90 = vpop.f32.mrf.mxu0
    %91 = vdwg.mxu0
    %v92 = vmax.f32 %v89, 0.0
    %s93 = scalar_lea.vmem [#allocation5], 64
    %v94 = vld [vmem:[%s93] sm:$0xf]
    %v95 = vld [vmem:[%s93 + $0x4] sm:$0xf]
    %v96 = vld [vmem:[%s93 + $0x8] sm:$0xf]
    %v97 = vld [vmem:[%s93 + $0xc] sm:$0xf]
    %v98 = vld [vmem:[%s93 + $0x10] sm:$0xf]
    %v99 = vld [vmem:[%s93 + $0x14] sm:$0xf]
    %v100 = vld [vmem:[%s93 + $0x18] sm:$0xf]
    %v101 = vld [vmem:[%s93 + $0x1c] sm:$0xf]
    %v102 = vld [vmem:[%s93 + $0x20] sm:$0xf]
    %v103 = vld [vmem:[%s93 + $0x24] sm:$0xf]
    %v104 = vld [vmem:[%s93 + $0x28] sm:$0xf]
    %v105 = vld [vmem:[%s93 + $0x2c] sm:$0xf]
    %v106 = vld [vmem:[%s93 + $0x30] sm:$0xf]
    %v107 = vld [vmem:[%s93 + $0x34] sm:$0xf]
    %v108 = vld [vmem:[%s93 + $0x38] sm:$0xf]
    %v109 = vld [vmem:[%s93 + $0x3c] sm:$0xf]
    %v110 = vpack.c.bf16 %v92, %v92
    %s111 = scalar_lea.vmem [#allocation7], 1
    %v112 = vld [vmem:[%s111] sm:$0x1]
    %v114 = vperm.slane %v112, 0
    %v132 = vunpack.c.l.b16 %v94
    %v133 = vunpack.c.l.b16 %v95
    %v134 = vunpack.c.l.b16 %v96
    %v135 = vunpack.c.l.b16 %v97
    %v136 = vunpack.c.l.b16 %v98
    %v137 = vunpack.c.l.b16 %v99
    %v138 = vunpack.c.l.b16 %v100
    %v139 = vunpack.c.l.b16 %v101
    %v140 = vunpack.c.l.b16 %v102
    %v141 = vunpack.c.l.b16 %v103
    %v142 = vunpack.c.l.b16 %v104
    %v143 = vunpack.c.l.b16 %v105
    %v144 = vunpack.c.l.b16 %v106
    %v145 = vunpack.c.l.b16 %v107
    %v146 = vunpack.c.l.b16 %v108
    %v147 = vunpack.c.l.b16 %v109
    %v148 = vpack.c.b16 %v133, %v132
    %v149 = vpack.c.b16 %v135, %v134
    %v150 = vpack.c.b16 %v137, %v136
    %v151 = vpack.c.b16 %v139, %v138
    %v152 = vpack.c.b16 %v141, %v140
    %v153 = vpack.c.b16 %v143, %v142
    %v154 = vpack.c.b16 %v145, %v144
    %v155 = vpack.c.b16 %v147, %v146
    %164 = vmatpush.bf16.msra.mxu0 %v155
    %165 = vmatpush.bf16.msra.mxu0 %v154
    %166 = vmatpush.bf16.msra.mxu0 %v153
    %167 = vmatpush.bf16.msra.mxu0 %v152
    %168 = vmatpush.bf16.msra.mxu0 %v151
    %169 = vmatpush.bf16.msra.mxu0 %v150
    %170 = vmatpush.bf16.msra.mxu0 %v149
    %171 = vmatpush.bf16.msra.mxu0 %v148
    %172 = vmatmul.bf16.gmra.mxu0 %v110
    %v173 = vpop.f32.mrf.mxu0
    %v174 = vadd.f32 %v114, %v173
    %v175 = vpop.f32.mrf.mxu0
    %176 = vdwg.mxu0
    %v177 = vmax.f32 %v174, 0.0
    %s178 = scalar_lea.vmem [#allocation5], 128
    %v179 = vld [vmem:[%s178] sm:$0xf]
    %v180 = vld [vmem:[%s178 + $0x4] sm:$0xf]
    %v181 = vld [vmem:[%s178 + $0x8] sm:$0xf]
    %v182 = vld [vmem:[%s178 + $0xc] sm:$0xf]
    %v183 = vld [vmem:[%s178 + $0x10] sm:$0xf]
    %v184 = vld [vmem:[%s178 + $0x14] sm:$0xf]
    %v185 = vld [vmem:[%s178 + $0x18] sm:$0xf]
    %v186 = vld [vmem:[%s178 + $0x1c] sm:$0xf]
    %v187 = vld [vmem:[%s178 + $0x20] sm:$0xf]
    %v188 = vld [vmem:[%s178 + $0x24] sm:$0xf]
    %v189 = vld [vmem:[%s178 + $0x28] sm:$0xf]
    %v190 = vld [vmem:[%s178 + $0x2c] sm:$0xf]
    %v191 = vld [vmem:[%s178 + $0x30] sm:$0xf]
    %v192 = vld [vmem:[%s178 + $0x34] sm:$0xf]
    %v193 = vld [vmem:[%s178 + $0x38] sm:$0xf]
    %v194 = vld [vmem:[%s178 + $0x3c] sm:$0xf]
    %v195 = vpack.c.bf16 %v177, %v177
    %s196 = scalar_lea.vmem [#allocation7], 2
    %v197 = vld [vmem:[%s196] sm:$0x1]
    %v199 = vperm.slane %v197, 0
    %v217 = vunpack.c.l.b16 %v179
    %v218 = vunpack.c.l.b16 %v180
    %v219 = vunpack.c.l.b16 %v181
    %v220 = vunpack.c.l.b16 %v182
    %v221 = vunpack.c.l.b16 %v183
    %v222 = vunpack.c.l.b16 %v184
    %v223 = vunpack.c.l.b16 %v185
    %v224 = vunpack.c.l.b16 %v186
    %v225 = vunpack.c.l.b16 %v187
    %v226 = vunpack.c.l.b16 %v188
    %v227 = vunpack.c.l.b16 %v189
    %v228 = vunpack.c.l.b16 %v190
    %v229 = vunpack.c.l.b16 %v191
    %v230 = vunpack.c.l.b16 %v192
    %v231 = vunpack.c.l.b16 %v193
    %v232 = vunpack.c.l.b16 %v194
    %v233 = vpack.c.b16 %v218, %v217
    %v234 = vpack.c.b16 %v220, %v219
    %v235 = vpack.c.b16 %v222, %v221
    %v236 = vpack.c.b16 %v224, %v223
    %v237 = vpack.c.b16 %v226, %v225
    %v238 = vpack.c.b16 %v228, %v227
    %v239 = vpack.c.b16 %v230, %v229
    %v240 = vpack.c.b16 %v232, %v231
    %249 = vmatpush.bf16.msra.mxu0 %v240
    %250 = vmatpush.bf16.msra.mxu0 %v239
    %251 = vmatpush.bf16.msra.mxu0 %v238
    %252 = vmatpush.bf16.msra.mxu0 %v237
    %253 = vmatpush.bf16.msra.mxu0 %v236
    %254 = vmatpush.bf16.msra.mxu0 %v235
    %255 = vmatpush.bf16.msra.mxu0 %v234
    %256 = vmatpush.bf16.msra.mxu0 %v233
    %257 = vmatmul.bf16.gmra.mxu0 %v195
    %v258 = vpop.f32.mrf.mxu0
    %v259 = vadd.f32 %v199, %v258
    %v260 = vpop.f32.mrf.mxu0
    %261 = vdwg.mxu0
    %v262 = vxor.u32 %v259, 2147483648
    %v263 = vmul.f32 %v262, 1.442695
    %v264 = vpow.pop %v263
    %v265 = vadd.f32 %v264, 1.0
    %v266 = vrcp.pop %v265
    %v267 = vmul.f32 %v265, %v266
    %v268 = vsub.f32 1.0, %v267
    %v269 = vmul.f32 %v266, %v268
    %v270 = vadd.f32 %v266, %v269
    %vm271 = vweird.f32 %v265
    %vm272 = vweird.f32 %v266
    %vm273 = vmor %vm271, %vm272
    %v274 = vsel %vm273, %v266, %v270
    %v275 = vand.u32 2147483647, %v265
    %vm276 = vcmp.eq.f32.partialorder %v275, 8.507059e+37
    %v277 = vand.u32 %v265, 2147483648
    %v278 = vor.u32 1.1754944e-38, %v277
    %v279 = vsel %vm276, %v278, %v274
    %v280 = vmul.f32 1.0, %v279
    %vm281 = vcmask 64512
    %282 = vst.msk [vmem:[#allocation8] sm:$0xff] %vm281, %v280
    // Predicated region
    $region26: #{net_forward.1} parent=1 // pred_check
      _
    $region27: #{net_forward.1} parent=1 // pred_check_branch
      %284 = sbr.rel (0) target = $region29
    $region28: #{net_forward.1} parent=1 // pred_region
      %286 = vsyncadd [#allocation4], 0
      %s288 = sshll.u32 [#allocation8], 4
      %s289 = int_to_ptr.vmem [resolvable:$true] %s288
      %s290 = sshll.u32 %s3, 4
      %s291 = int_to_ptr.hbm [resolvable:$true] %s290
      %293 = dma.vmem_to_hbm [thread:$0]  %s289, 128, %s291, [#allocation4]
    $region29: #{net_forward.1} parent=1 // pred_fallthru
      _
    // Predicated region
    $region30: #{net_forward.1} parent=1 // pred_check
      _
    $region31: #{net_forward.1} parent=1 // pred_check_branch
      %295 = sbr.rel (0) target = $region33
    $region32: #{net_forward.1} parent=1 // pred_region
      %297 = dma.done [#allocation4], 128
    $region33: #{net_forward.1} parent=1 // pred_fallthru
      _
    %298 = vsyncpa [#allocation3], 1
    %299 = vsyncpa [#allocation6], 1
    %300 = vsyncpa [#allocation4], 1

</llo_original>
